<compile_context>
chip_gen: v6e
topology: v6e:2x2x1
jax: 0.10.0
libtpu: 0.0.40
codegen_flags: <defaults>
</compile_context>

<pallas_src>
import jax
import jax.numpy as jnp
from jax.experimental import pallas as pl
from jax.experimental.pallas import tpu as pltpu


_LANE_WIDTH = 1024     # lane-dense last dim (multiple of 128)
_MAX_TILE_ROWS = 512   # 512 x 1024 x 4B = 2 MiB per f32 block (4 MiB double-buffered)
_N_SPLIT = 2           # leading "parallel" axis -> both TCs on v7x; cheap on v5e/v6e


def _quant_loss_kernel(x_ref, sum_out, cnt_out, sum_acc, cnt_acc):
    i = pl.program_id(1)  # reduction ("arbitrary") axis

    @pl.when(i == 0)
    def _():
        sum_acc[...] = jnp.zeros_like(sum_acc)
        cnt_acc[...] = jnp.zeros_like(cnt_acc)

    x = x_ref[...].astype(jnp.float32)
    mask = x > 0.0
    # torch.round == round-half-to-even == jnp.round
    diff = jnp.where(mask, jnp.abs(x - jnp.round(x)), 0.0)
    ones = mask.astype(jnp.int32)

    tile_r, width = x_ref.shape
    # Fold the row block down onto 8 sublanes: pure VPU adds on the
    # per-iteration path; no cross-lane (XLU) work until the final step.
    sum_acc[...] += diff.reshape(tile_r // 8, 8, width).sum(axis=0)
    cnt_acc[...] += ones.reshape(tile_r // 8, 8, width).sum(axis=0)

    @pl.when(i == pl.num_programs(1) - 1)
    def _():
        total = jnp.sum(sum_acc[...])
        count = jnp.sum(cnt_acc[...]).astype(jnp.float32)
        sum_out[...] = jnp.zeros((1, 1, 1), jnp.float32) + total
        cnt_out[...] = jnp.zeros((1, 1, 1), jnp.float32) + count


def quantization_loss(y_pred):
    """y_pred: [bs, 1, ht, wd] (post-ReLU instance map), any float dtype."""
    flat = y_pred.reshape(-1)
    n = flat.shape[0]

    lane_w = _LANE_WIDTH
    rows = pl.cdiv(n, lane_w)
    rows = pl.cdiv(rows, 8) * 8                          # sublane granularity
    tile_r = min(_MAX_TILE_ROWS, rows)                   # multiple of 8
    rows = pl.cdiv(rows, _N_SPLIT * tile_r) * (_N_SPLIT * tile_r)

    padded = rows * lane_w
    if padded != n:
        # zero padding is correctness-neutral: padded elements fail x > 0
        flat = jnp.pad(flat, (0, padded - n))
    x2d = flat.reshape(rows, lane_w)

    steps = rows // (_N_SPLIT * tile_r)
    grid = (_N_SPLIT, steps)

    sum_parts, cnt_parts = pl.pallas_call(
        _quant_loss_kernel,
        out_shape=(
            jax.ShapeDtypeStruct((_N_SPLIT, 1, 1), jnp.float32),
            jax.ShapeDtypeStruct((_N_SPLIT, 1, 1), jnp.float32),
        ),
        grid_spec=pltpu.PrefetchScalarGridSpec(
            num_scalar_prefetch=0,
            grid=grid,
            in_specs=[
                pl.BlockSpec((tile_r, lane_w), lambda p, i: (p * steps + i, 0)),
            ],
            out_specs=(
                pl.BlockSpec((1, 1, 1), lambda p, i: (p, 0, 0)),
                pl.BlockSpec((1, 1, 1), lambda p, i: (p, 0, 0)),
            ),
            scratch_shapes=[
                pltpu.VMEM((8, lane_w), jnp.float32),   # masked |x - round(x)| partials
                pltpu.VMEM((8, lane_w), jnp.int32),     # foreground counts (exact)
            ],
        ),
        compiler_params=pltpu.CompilerParams(
            dimension_semantics=("parallel", "arbitrary"),
        ),
        cost_estimate=pl.CostEstimate(
            flops=5 * padded,
            transcendentals=0,
            bytes_accessed=padded * x2d.dtype.itemsize + 8 * _N_SPLIT,
        ),
    )(x2d)

    s = jnp.sum(sum_parts)
    c = jnp.sum(cnt_parts)
    # torch: NaN (no foreground) -> 0.0
    return jnp.where(c > 0.0, s / jnp.maximum(c, 1.0), jnp.float32(0.0))


def _reference_loss(y_pred):
    x = y_pred.astype(jnp.float32)
    mask = x > 0.0
    s = jnp.sum(jnp.where(mask, jnp.abs(x - jnp.round(x)), 0.0))
    c = jnp.sum(mask.astype(jnp.float32))
    return jnp.where(c > 0.0, s / jnp.maximum(c, 1.0), jnp.float32(0.0))


if __name__ == "__main__":
    key = jax.random.PRNGKey(0)

    # Case 1: small instance map matching the module spec [bs, 1, ht, wd].
    bs, c, ht, wd = 2, 1, 16, 16
    raw = jax.random.normal(key, (bs, c, ht, wd), dtype=jnp.float32) * 3.0
    y_pred = jnp.maximum(raw, 0.0)   # post-ReLU: zeros = background
    out = jax.block_until_ready(quantization_loss(y_pred))
    ref = jax.block_until_ready(_reference_loss(y_pred))
    assert jnp.allclose(out, ref, atol=1e-5, rtol=1e-5), (out, ref)

    # Case 2: odd spatial size (exercises the padding path) with bf16 input.
    raw2 = jax.random.normal(jax.random.PRNGKey(0), (2, 1, 24, 20),
                             dtype=jnp.float32) * 2.0
    y2 = jnp.maximum(raw2, 0.0).astype(jnp.bfloat16)
    out2 = jax.block_until_ready(quantization_loss(y2))
    ref2 = jax.block_until_ready(_reference_loss(y2))
    assert jnp.allclose(out2, ref2, atol=1e-5, rtol=1e-5), (out2, ref2)

    # Case 3: all background -> torch NaN path -> module returns 0.0.
    y3 = jnp.zeros((1, 1, 16, 16), dtype=jnp.float32)
    out3 = jax.block_until_ready(quantization_loss(y3))
    assert jnp.allclose(out3, 0.0), out3

    print("KERNEL_OK")
</pallas_src>

<mosaic_0001>
module attributes {stable_mosaic.version = 11 : i64} {
  func.func @_quant_loss_kernel(%arg0: i32, %arg1: i32, %arg2: memref<8x1024xf32, #tpu.memory_space<vmem>>, %arg3: memref<1x1x1xf32, #tpu.memory_space<vmem>>, %arg4: memref<1x1x1xf32, #tpu.memory_space<vmem>>, %arg5: memref<8x1024xf32, #tpu.memory_space<vmem>>, %arg6: memref<8x1024xi32, #tpu.memory_space<vmem>>) attributes {dimension_semantics = [#tpu.dimension_semantics<parallel>, #tpu.dimension_semantics<arbitrary>], iteration_bounds = array<i64: 2, 1>, scalar_prefetch = 0 : i64, scratch_operands = 2 : i64, tpu.core_type = #tpu.core_type<tc>, window_params = [{transform_indices = @transform_0, window_bounds = array<i64: 8, 1024>}, {transform_indices = @transform_1, window_bounds = array<i64: 1, 1, 1>}, {transform_indices = @transform_2, window_bounds = array<i64: 1, 1, 1>}]} {
    %c0_i32 = arith.constant 0 : i32
    %0 = arith.cmpi eq, %arg1, %c0_i32 : i32
    %1 = arith.extui %0 : i1 to i32
    %c0_i32_0 = arith.constant 0 : i32
    %2 = arith.cmpi ne, %1, %c0_i32_0 : i32
    scf.if %2 {
      %cst_15 = arith.constant 0.000000e+00 : f32
      %25 = vector.broadcast %cst_15 : f32 to vector<8x1024xf32>
      %c0_16 = arith.constant 0 : index
      %c0_17 = arith.constant 0 : index
      %26 = vector.load %arg5[%c0_16, %c0_17] : memref<8x1024xf32, #tpu.memory_space<vmem>>, vector<8x1024xf32>
      tpu.vector_store %arg5[%c0_16, %c0_17], %25 {strides = array<i32>} : memref<8x1024xf32, #tpu.memory_space<vmem>>, vector<8x1024xf32>,
      %c0_i32_18 = arith.constant 0 : i32
      %27 = vector.broadcast %c0_i32_18 : i32 to vector<8x1024xi32>
      %c0_19 = arith.constant 0 : index
      %c0_20 = arith.constant 0 : index
      %28 = vector.load %arg6[%c0_19, %c0_20] : memref<8x1024xi32, #tpu.memory_space<vmem>>, vector<8x1024xi32>
      tpu.vector_store %arg6[%c0_19, %c0_20], %27 {strides = array<i32>} : memref<8x1024xi32, #tpu.memory_space<vmem>>, vector<8x1024xi32>,
    } else {
    }
    %c0 = arith.constant 0 : index
    %c0_1 = arith.constant 0 : index
    %3 = vector.load %arg2[%c0, %c0_1] : memref<8x1024xf32, #tpu.memory_space<vmem>>, vector<8x1024xf32>
    %cst = arith.constant 0.000000e+00 : f32
    %4 = vector.broadcast %cst : f32 to vector<8x1024xf32>
    %5 = arith.cmpf ogt, %3, %4 : vector<8x1024xf32>
    %6 = math.roundeven %3 : vector<8x1024xf32>
    %7 = arith.subf %3, %6 : vector<8x1024xf32>
    %8 = math.absf %7 : vector<8x1024xf32>
    %cst_2 = arith.constant 0.000000e+00 : f32
    %9 = vector.broadcast %cst_2 : f32 to vector<8x1024xf32>
    %10 = arith.select %5, %8, %9 : vector<8x1024xi1>, vector<8x1024xf32>
    %11 = arith.extui %5 : vector<8x1024xi1> to vector<8x1024xi32>
    %c0_3 = arith.constant 0 : index
    %c0_4 = arith.constant 0 : index
    %12 = vector.load %arg5[%c0_3, %c0_4] : memref<8x1024xf32, #tpu.memory_space<vmem>>, vector<8x1024xf32>
    %13 = vector.shape_cast %10 : vector<8x1024xf32> to vector<1x8x1024xf32>
    %cst_5 = arith.constant dense<0.000000e+00> : vector<8x1024xf32>
    %14 = vector.multi_reduction <add>, %13, %cst_5 [0] : vector<1x8x1024xf32> to vector<8x1024xf32>
    %15 = arith.addf %12, %14 : vector<8x1024xf32>
    %c0_6 = arith.constant 0 : index
    %c0_7 = arith.constant 0 : index
    %16 = vector.load %arg5[%c0_6, %c0_7] : memref<8x1024xf32, #tpu.memory_space<vmem>>, vector<8x1024xf32>
    tpu.vector_store %arg5[%c0_6, %c0_7], %15 {strides = array<i32>} : memref<8x1024xf32, #tpu.memory_space<vmem>>, vector<8x1024xf32>,
    %c0_8 = arith.constant 0 : index
    %c0_9 = arith.constant 0 : index
    %17 = vector.load %arg6[%c0_8, %c0_9] : memref<8x1024xi32, #tpu.memory_space<vmem>>, vector<8x1024xi32>
    %18 = vector.shape_cast %11 : vector<8x1024xi32> to vector<1x8x1024xi32>
    %cst_10 = arith.constant dense<0> : vector<8x1024xi32>
    %19 = vector.multi_reduction <add>, %18, %cst_10 [0] : vector<1x8x1024xi32> to vector<8x1024xi32>
    %20 = arith.addi %17, %19 : vector<8x1024xi32>
    %c0_11 = arith.constant 0 : index
    %c0_12 = arith.constant 0 : index
    %21 = vector.load %arg6[%c0_11, %c0_12] : memref<8x1024xi32, #tpu.memory_space<vmem>>, vector<8x1024xi32>
    tpu.vector_store %arg6[%c0_11, %c0_12], %20 {strides = array<i32>} : memref<8x1024xi32, #tpu.memory_space<vmem>>, vector<8x1024xi32>,
    %c0_i32_13 = arith.constant 0 : i32
    %22 = arith.cmpi eq, %arg1, %c0_i32_13 : i32
    %23 = arith.extui %22 : i1 to i32
    %c0_i32_14 = arith.constant 0 : i32
    %24 = arith.cmpi ne, %23, %c0_i32_14 : i32
    scf.if %24 {
      %c0_15 = arith.constant 0 : index
      %c0_16 = arith.constant 0 : index
      %25 = vector.load %arg5[%c0_15, %c0_16] : memref<8x1024xf32, #tpu.memory_space<vmem>>, vector<8x1024xf32>
      %26 = vector.shape_cast %25 : vector<8x1024xf32> to vector<1x8x1024xf32>
      %cst_17 = arith.constant dense<0.000000e+00> : vector<1xf32>
      %27 = vector.multi_reduction <add>, %26, %cst_17 [1, 2] : vector<1x8x1024xf32> to vector<1xf32>
      %28 = vector.shape_cast %27 : vector<1xf32> to vector<1x1x1xf32>
      %29 = vector.extract %28[0, 0, 0] : f32 from vector<1x1x1xf32>
      %c0_18 = arith.constant 0 : index
      %c0_19 = arith.constant 0 : index
      %30 = vector.load %arg6[%c0_18, %c0_19] : memref<8x1024xi32, #tpu.memory_space<vmem>>, vector<8x1024xi32>
      %31 = vector.shape_cast %30 : vector<8x1024xi32> to vector<1x8x1024xi32>
      %cst_20 = arith.constant dense<0> : vector<1xi32>
      %32 = vector.multi_reduction <add>, %31, %cst_20 [1, 2] : vector<1x8x1024xi32> to vector<1xi32>
      %33 = vector.shape_cast %32 : vector<1xi32> to vector<1x1x1xi32>
      %34 = vector.extract %33[0, 0, 0] : i32 from vector<1x1x1xi32>
      %35 = arith.sitofp %34 : i32 to f32
      %cst_21 = arith.constant 0.000000e+00 : f32
      %36 = vector.broadcast %cst_21 : f32 to vector<1x1x1xf32>
      %37 = vector.broadcast %29 : f32 to vector<1x1x1xf32>
      %38 = arith.addf %36, %37 : vector<1x1x1xf32>
      %c0_22 = arith.constant 0 : index
      %c0_23 = arith.constant 0 : index
      %c0_24 = arith.constant 0 : index
      %39 = vector.load %arg3[%c0_22, %c0_23, %c0_24] : memref<1x1x1xf32, #tpu.memory_space<vmem>>, vector<1x1x1xf32>
      tpu.vector_store %arg3[%c0_22, %c0_23, %c0_24], %38 {strides = array<i32>} : memref<1x1x1xf32, #tpu.memory_space<vmem>>, vector<1x1x1xf32>,
      %cst_25 = arith.constant 0.000000e+00 : f32
      %40 = vector.broadcast %cst_25 : f32 to vector<1x1x1xf32>
      %41 = vector.broadcast %35 : f32 to vector<1x1x1xf32>
      %42 = arith.addf %40, %41 : vector<1x1x1xf32>
      %c0_26 = arith.constant 0 : index
      %c0_27 = arith.constant 0 : index
      %c0_28 = arith.constant 0 : index
      %43 = vector.load %arg4[%c0_26, %c0_27, %c0_28] : memref<1x1x1xf32, #tpu.memory_space<vmem>>, vector<1x1x1xf32>
      tpu.vector_store %arg4[%c0_26, %c0_27, %c0_28], %42 {strides = array<i32>} : memref<1x1x1xf32, #tpu.memory_space<vmem>>, vector<1x1x1xf32>,
    } else {
    }
    return
  }
  func.func @transform_0(%arg0: i32, %arg1: i32) -> (i32, i32) {
    %c1_i32 = arith.constant 1 : i32
    %0 = arith.muli %arg0, %c1_i32 : i32
    %1 = arith.addi %0, %arg1 : i32
    %c0_i32 = arith.constant 0 : i32
    %c0_i32_0 = arith.constant 0 : i32
    return %1, %c0_i32 : i32, i32
  }
  func.func @transform_1(%arg0: i32, %arg1: i32) -> (i32, i32, i32) {
    %c0_i32 = arith.constant 0 : i32
    %c0_i32_0 = arith.constant 0 : i32
    %c0_i32_1 = arith.constant 0 : i32
    return %arg0, %c0_i32, %c0_i32_0 : i32, i32, i32
  }
  func.func @transform_2(%arg0: i32, %arg1: i32) -> (i32, i32, i32) {
    %c0_i32 = arith.constant 0 : i32
    %c0_i32_0 = arith.constant 0 : i32
    %c0_i32_1 = arith.constant 0 : i32
    return %arg0, %c0_i32, %c0_i32_0 : i32, i32, i32
  }
}

</mosaic_0001>

<llo_original>
// kernel: tpu_custom_call.1
$region0: #{tpu_custom_call.1}
  #allocation0 [shape = 'u32[]', space=smem, size = 0x4, offset = 0x4, fixed_abs, tag = 'smem constant byte address 0x4 - core index']
  #allocation1 [shape = 'u32[144,128]{1,0:T(1,128)}', space=vmem, size = 0x12000, scoped, tag = 'internal scratch']
  #allocation2 [shape = 'f32[8,1024]{1,0:T(8,128)}', space=vmem, size = 0x8000, scoped, tag = 'scratch operand']
  #allocation3 [shape = 's32[8,1024]{1,0:T(8,128)}', space=vmem, size = 0x8000, scoped, tag = 'scratch operand']
  %s0 = inlined_call_operand.hbm [shape: f32[16,1024], index: 0, kind: input, shape index: {}]
  %s1 = inlined_call_operand.vmem [shape: f32[2,1,1], index: 1, kind: output, shape index: {0}]
  %s2 = inlined_call_operand.vmem [shape: f32[2,1,1], index: 2, kind: output, shape index: {1}]
  %3 = xla_tuple %s1, %s2
  %s4 = sld [smem:[#allocation0]]
  $region57: #{tpu_custom_call.1} parent=0
    _
  %s6 = ssub.s32 1, %s4
  %s7 = scalar_select 0, %s6, %s4
  $region1: #{tpu_custom_call.1} parent=0
    #allocation4 [shape = 'u8[65536]{0}', space=vmem, size = 0x10000, scoped, tag = 'input window, operand 0']
    #allocation5 [shape = 's32[2]{0}', space=sflag, size = 0x8, scoped, tag = 'scoped memory for tpu_custom_call.1']
    %8 = vsyncpa [#allocation5], 0
    %s9 = scalar_lea.sflag [#allocation5], 1
    %10 = vsyncpa %s9, 0
    loop: start=0, step=1, limit=4
    $region2: #{tpu_custom_call.1} parent=1 // loop_pre_header
      _
    $region3: #{tpu_custom_call.1} parent=1 // loop_header
      %s12 = sphi 0, %s16
      %p13 = scmp.ge.s32.totalorder %s12, 4
      %s19 = sphi 0, %s31
      %s20 = sphi 0, %s27
      %s21 = sphi 0, %s19
      %s22 = sphi 0, %s20
      %s23 = sphi 0, %s21
      %s24 = sphi 0, %s22
      %s36 = sphi 0, %s38
      %s39 = sphi 0, %s36
      %s40 = sphi 0, %s39
      %s56 = sphi 0, %s40
      %s62 = sphi 0, %s64
      %s65 = sphi 0, %s62
      %s66 = sphi 0, %s65
      %s82 = sphi 0, %s66
      %s88 = sphi 0, %s90
      %s91 = sphi 0, %s88
      %s92 = sphi 0, %s91
      %s108 = sphi 0, %s92
    $region4: #{tpu_custom_call.1} parent=1 // loop_header_branch
      %15 = sbr.rel (%p13) target = $region8
    $region5: #{tpu_custom_call.1} parent=1 // loop_body
      %s17 = ssub.s32 %s12, 1
      %s18 = ssub.s32 %s12, 2
      %s25 = sadd.s32 1, %s20
      %p26 = scmp.ge.s32.totalorder %s25, 1
      %s27 = scalar_select %p26, 0, %s25
      %s28 = sadd.s32 1, %s19
      %s29 = scalar_select %p26, %s28, %s19
      %p30 = scmp.ge.s32.totalorder %s29, 2
      %s31 = scalar_select %p30, 0, %s29
      %s32 = sadd.s32 %s19, %s20
      %s33 = sadd.s32 %s31, %s27
      %s34 = ssub.s32 %s32, %s33
      %p35 = scmp.eq.s32.totalorder %s34, 0
      %s37 = sadd.s32 %s36, 1
      %s38 = scalar_select %p35, %s36, %s37
      %p41 = pneg %p35
      %p42 = scmp.eq.s32.totalorder %s12, 1
      %p43 = por %p41, %p42
      %p44 = scmp.ne.s32.totalorder %s36, %s39
      %p45 = scmp.eq.s32.totalorder %s12, 0
      %p46 = por %p44, %p45
      %p47 = scmp.ne.s32.totalorder %s36, %s39
      %p48 = scmp.eq.s32.totalorder %s17, 1
      %p49 = por %p47, %p48
      %p50 = scmp.ne.s32.totalorder %s39, %s40
      %p51 = scmp.eq.s32.totalorder %s17, 0
      %p52 = por %p50, %p51
      %p53 = scmp.ne.s32.totalorder %s39, %s40
      %p54 = scmp.eq.s32.totalorder %s18, 1
      %p55 = por %p53, %p54
      %p57 = scmp.ne.s32.totalorder %s40, %s56
      %p58 = scmp.eq.s32.totalorder %s18, 0
      %p59 = por %p57, %p58
      %s60 = ssub.s32 %s19, %s31
      %p61 = scmp.eq.s32.totalorder %s60, 0
      %s63 = sadd.s32 %s62, 1
      %s64 = scalar_select %p61, %s62, %s63
      %p67 = pneg %p61
      %p68 = scmp.eq.s32.totalorder %s12, 1
      %p69 = por %p67, %p68
      %p70 = scmp.ne.s32.totalorder %s62, %s65
      %p71 = scmp.eq.s32.totalorder %s12, 0
      %p72 = por %p70, %p71
      %p73 = scmp.ne.s32.totalorder %s62, %s65
      %p74 = scmp.eq.s32.totalorder %s17, 1
      %p75 = por %p73, %p74
      %p76 = scmp.ne.s32.totalorder %s65, %s66
      %p77 = scmp.eq.s32.totalorder %s17, 0
      %p78 = por %p76, %p77
      %p79 = scmp.ne.s32.totalorder %s65, %s66
      %p80 = scmp.eq.s32.totalorder %s18, 1
      %p81 = por %p79, %p80
      %p83 = scmp.ne.s32.totalorder %s66, %s82
      %p84 = scmp.eq.s32.totalorder %s18, 0
      %p85 = por %p83, %p84
      %s86 = ssub.s32 %s19, %s31
      %p87 = scmp.eq.s32.totalorder %s86, 0
      %s89 = sadd.s32 %s88, 1
      %s90 = scalar_select %p87, %s88, %s89
      %p93 = pneg %p87
      %p94 = scmp.eq.s32.totalorder %s12, 1
      %p95 = por %p93, %p94
      %p96 = scmp.ne.s32.totalorder %s88, %s91
      %p97 = scmp.eq.s32.totalorder %s12, 0
      %p98 = por %p96, %p97
      %p99 = scmp.ne.s32.totalorder %s88, %s91
      %p100 = scmp.eq.s32.totalorder %s17, 1
      %p101 = por %p99, %p100
      %p102 = scmp.ne.s32.totalorder %s91, %s92
      %p103 = scmp.eq.s32.totalorder %s17, 0
      %p104 = por %p102, %p103
      %p105 = scmp.ne.s32.totalorder %s91, %s92
      %p106 = scmp.eq.s32.totalorder %s18, 1
      %p107 = por %p105, %p106
      %p109 = scmp.ne.s32.totalorder %s92, %s108
      %p110 = scmp.eq.s32.totalorder %s18, 0
      %p111 = por %p109, %p110
      %p112 = scmp.le.s32.totalorder 1, %s12
      %p113 = scmp.lt.s32.totalorder %s12, 3
      %p114 = pnand %p112, %p113
      %p115 = pneg %p114
      // Predicated region
      $region9: #{tpu_custom_call.1} parent=5 // pred_check
        _
      $region10: #{tpu_custom_call.1} parent=5 // pred_check_branch
        %117 = sbr.rel (%p114) target = $region12
      $region11: #{tpu_custom_call.1} parent=5 // pred_region
        %s118 = ssub.s32 %s12, 1
      $region12: #{tpu_custom_call.1} parent=5 // pred_fallthru
        _
      %p119 = scmp.lt.s32.totalorder %s12, 2
      // Predicated region
      $region13: #{tpu_custom_call.1} parent=5 // pred_check
        %p120 = pneg %p119
      $region14: #{tpu_custom_call.1} parent=5 // pred_check_branch
        %122 = sbr.rel (%p120) target = $region16
      $region15: #{tpu_custom_call.1} parent=5 // pred_region
        // Predicated region
        $region17: #{tpu_custom_call.1} parent=15 // pred_check
          %p123 = pneg %p46
        $region18: #{tpu_custom_call.1} parent=15 // pred_check_branch
          %125 = sbr.rel (%p123) target = $region20
        $region19: #{tpu_custom_call.1} parent=15 // pred_region
          %s126 = sand.u32 %s36, 1
          %s127 = scalar_lea.sflag [#allocation5], %s126
          %s128 = sand.u32 %s36, 1
          %s129 = smul.addr %s128, 64
          %s130 = scalar_lea.vmem [#allocation4], %s129
          %s131 = sadd.s32 %s19, %s20
          %s133 = ssub.s32 1024, 1024
          %134 = vsyncadd %s127, %s133
          %s135 = smul.addr %s131, 8
          %s136 = smul.addr %s135, 128
          %s137 = scalar_lea.hbm %s0, %s136
          %s139 = sshll.u32 %s130, 4
          %s140 = int_to_ptr.vmem [resolvable:$true] %s139
          %142 = dma.hbm_to_vmem [thread:$0]  %s137, 1024, %s140, %s127
        $region20: #{tpu_custom_call.1} parent=15 // pred_fallthru
          _
      $region16: #{tpu_custom_call.1} parent=5 // pred_fallthru
        _
      %p143 = scmp.le.s32.totalorder 1, %s12
      %p144 = scmp.lt.s32.totalorder %s12, 3
      %p145 = pnand %p143, %p144
      %p146 = pneg %p145
      // Predicated region
      $region21: #{tpu_custom_call.1} parent=5 // pred_check
        _
      $region22: #{tpu_custom_call.1} parent=5 // pred_check_branch
        %148 = sbr.rel (%p145) target = $region24
      $region23: #{tpu_custom_call.1} parent=5 // pred_region
        %s149 = ssub.s32 %s12, 1
        %s150 = sand.u32 %s39, 1
        %s151 = scalar_lea.sflag [#allocation5], %s150
        %s152 = sand.u32 %s39, 1
        %s153 = smul.addr %s152, 64
        %s154 = scalar_lea.vmem [#allocation4], %s153
        // Predicated region
        $region25: #{tpu_custom_call.1} parent=23 // pred_check
          %p155 = pneg %p52
        $region26: #{tpu_custom_call.1} parent=23 // pred_check_branch
          %157 = sbr.rel (%p155) target = $region28
        $region27: #{tpu_custom_call.1} parent=23 // pred_region
          %158 = dma.done %s151, 1024
        $region28: #{tpu_custom_call.1} parent=23 // pred_fallthru
          _
        %s159 = sand.u32 %s39, 1
        %s160 = scalar_lea.sflag [#allocation5], %s159
        %s161 = sand.u32 %s39, 1
        %s162 = smul.addr %s161, 64
        %s163 = scalar_lea.vmem [#allocation4], %s162
        %p164 = pneg %p52
        %p165 = pneg %p49
        %p166 = pneg %p78
        %p167 = pneg %p75
        %p168 = scmp.lt.s32.totalorder %s21, 1
        %s169 = scalar_select %p168, %s21, 1
        %s170 = scalar_lea.vmem %s1, %s169
        %p171 = pneg %p104
        %p172 = pneg %p101
        %p173 = scmp.lt.s32.totalorder %s21, 1
        %s174 = scalar_select %p173, %s21, 1
        %s175 = scalar_lea.vmem %s2, %s174
        %s176 = sadd.s32 %s21, %s22
        %p177 = scmp.lt.s32.totalorder %s21, 1
        %s178 = scalar_select %p177, %s21, 1
        %s179 = scalar_lea.vmem %s1, %s178
        %p180 = scmp.lt.s32.totalorder %s21, 1
        %s181 = scalar_select %p180, %s21, 1
        %s182 = scalar_lea.vmem %s2, %s181
        %p183 = scmp.eq.s32.totalorder %s22, 0
        // Predicated region
        $region29: #{tpu_custom_call.1} parent=23 // pred_check
          %p184 = pneg %p183
        $region30: #{tpu_custom_call.1} parent=23 // pred_check_branch
          %186 = sbr.rel (%p184) target = $region32
        $region31: #{tpu_custom_call.1} parent=23 // pred_region
          %187 = vst [vmem:[#allocation2] sm:$0xff] 0.0
          %188 = vst [vmem:[#allocation2 + $0x8] sm:$0xff] 0.0
          %189 = vst [vmem:[#allocation2 + $0x10] sm:$0xff] 0.0
          %190 = vst [vmem:[#allocation2 + $0x18] sm:$0xff] 0.0
          %191 = vst [vmem:[#allocation2 + $0x20] sm:$0xff] 0.0
          %192 = vst [vmem:[#allocation2 + $0x28] sm:$0xff] 0.0
          %193 = vst [vmem:[#allocation2 + $0x30] sm:$0xff] 0.0
          %194 = vst [vmem:[#allocation2 + $0x38] sm:$0xff] 0.0
          %195 = vst [vmem:[#allocation3] sm:$0xff] 0
          %196 = vst [vmem:[#allocation3 + $0x8] sm:$0xff] 0
          %197 = vst [vmem:[#allocation3 + $0x10] sm:$0xff] 0
          %198 = vst [vmem:[#allocation3 + $0x18] sm:$0xff] 0
          %199 = vst [vmem:[#allocation3 + $0x20] sm:$0xff] 0
          %200 = vst [vmem:[#allocation3 + $0x28] sm:$0xff] 0
          %201 = vst [vmem:[#allocation3 + $0x30] sm:$0xff] 0
          %202 = vst [vmem:[#allocation3 + $0x38] sm:$0xff] 0
        $region32: #{tpu_custom_call.1} parent=23 // pred_fallthru
          _
        %v203 = vld [vmem:[%s154] sm:$0xff]
        %v204 = vld [vmem:[%s154 + $0x8] sm:$0xff]
        %v205 = vld [vmem:[%s154 + $0x10] sm:$0xff]
        %v206 = vld [vmem:[%s154 + $0x18] sm:$0xff]
        %v207 = vld [vmem:[%s154 + $0x20] sm:$0xff]
        %v208 = vld [vmem:[%s154 + $0x28] sm:$0xff]
        %v209 = vld [vmem:[%s154 + $0x30] sm:$0xff]
        %v210 = vld [vmem:[%s154 + $0x38] sm:$0xff]
        %vm211 = vcmp.gt.f32.partialorder %v203, 0.0
        %vm212 = vcmp.gt.f32.partialorder %v204, 0.0
        %vm213 = vcmp.gt.f32.partialorder %v205, 0.0
        %vm214 = vcmp.gt.f32.partialorder %v206, 0.0
        %vm215 = vcmp.gt.f32.partialorder %v207, 0.0
        %vm216 = vcmp.gt.f32.partialorder %v208, 0.0
        %vm217 = vcmp.gt.f32.partialorder %v209, 0.0
        %vm218 = vcmp.gt.f32.partialorder %v210, 0.0
        %v219 = vround.ne.pseudo %v203
        %v220 = vround.ne.pseudo %v204
        %v221 = vround.ne.pseudo %v205
        %v222 = vround.ne.pseudo %v206
        %v223 = vround.ne.pseudo %v207
        %v224 = vround.ne.pseudo %v208
        %v225 = vround.ne.pseudo %v209
        %v226 = vround.ne.pseudo %v210
        %v227 = vsub.f32 %v203, %v219
        %v228 = vsub.f32 %v204, %v220
        %v229 = vsub.f32 %v205, %v221
        %v230 = vsub.f32 %v206, %v222
        %v231 = vsub.f32 %v207, %v223
        %v232 = vsub.f32 %v208, %v224
        %v233 = vsub.f32 %v209, %v225
        %v234 = vsub.f32 %v210, %v226
        %v235 = vand.u32 2147483647, %v227
        %v236 = vand.u32 2147483647, %v228
        %v237 = vand.u32 2147483647, %v229
        %v238 = vand.u32 2147483647, %v230
        %v239 = vand.u32 2147483647, %v231
        %v240 = vand.u32 2147483647, %v232
        %v241 = vand.u32 2147483647, %v233
        %v242 = vand.u32 2147483647, %v234
        %v243 = vsel %vm211, %v235, 0.0
        %v244 = vsel %vm212, %v236, 0.0
        %v245 = vsel %vm213, %v237, 0.0
        %v246 = vsel %vm214, %v238, 0.0
        %v247 = vsel %vm215, %v239, 0.0
        %v248 = vsel %vm216, %v240, 0.0
        %v249 = vsel %vm217, %v241, 0.0
        %v250 = vsel %vm218, %v242, 0.0
        %v251 = vsel %vm211, 1, 0
        %v252 = vsel %vm212, 1, 0
        %v253 = vsel %vm213, 1, 0
        %v254 = vsel %vm214, 1, 0
        %v255 = vsel %vm215, 1, 0
        %v256 = vsel %vm216, 1, 0
        %v257 = vsel %vm217, 1, 0
        %v258 = vsel %vm218, 1, 0
        %v259 = vld [vmem:[#allocation2] sm:$0xff]
        %v260 = vld [vmem:[#allocation2 + $0x8] sm:$0xff]
        %v261 = vld [vmem:[#allocation2 + $0x10] sm:$0xff]
        %v262 = vld [vmem:[#allocation2 + $0x18] sm:$0xff]
        %v263 = vld [vmem:[#allocation2 + $0x20] sm:$0xff]
        %v264 = vld [vmem:[#allocation2 + $0x28] sm:$0xff]
        %v265 = vld [vmem:[#allocation2 + $0x30] sm:$0xff]
        %v266 = vld [vmem:[#allocation2 + $0x38] sm:$0xff]
        %v267 = vadd.f32 %v243, 0.0
        %v268 = vadd.f32 %v244, 0.0
        %v269 = vadd.f32 %v245, 0.0
        %v270 = vadd.f32 %v246, 0.0
        %v271 = vadd.f32 %v247, 0.0
        %v272 = vadd.f32 %v248, 0.0
        %v273 = vadd.f32 %v249, 0.0
        %v274 = vadd.f32 %v250, 0.0
        %v275 = vadd.f32 %v259, %v267
        %v276 = vadd.f32 %v260, %v268
        %v277 = vadd.f32 %v261, %v269
        %v278 = vadd.f32 %v262, %v270
        %v279 = vadd.f32 %v263, %v271
        %v280 = vadd.f32 %v264, %v272
        %v281 = vadd.f32 %v265, %v273
        %v282 = vadd.f32 %v266, %v274
        %283 = vst [vmem:[#allocation2] sm:$0xff] %v275
        %284 = vst [vmem:[#allocation2 + $0x8] sm:$0xff] %v276
        %285 = vst [vmem:[#allocation2 + $0x10] sm:$0xff] %v277
        %286 = vst [vmem:[#allocation2 + $0x18] sm:$0xff] %v278
        %287 = vst [vmem:[#allocation2 + $0x20] sm:$0xff] %v279
        %288 = vst [vmem:[#allocation2 + $0x28] sm:$0xff] %v280
        %289 = vst [vmem:[#allocation2 + $0x30] sm:$0xff] %v281
        %290 = vst [vmem:[#allocation2 + $0x38] sm:$0xff] %v282
        %v291 = vld [vmem:[#allocation3] sm:$0xff]
        %v292 = vld [vmem:[#allocation3 + $0x8] sm:$0xff]
        %v293 = vld [vmem:[#allocation3 + $0x10] sm:$0xff]
        %v294 = vld [vmem:[#allocation3 + $0x18] sm:$0xff]
        %v295 = vld [vmem:[#allocation3 + $0x20] sm:$0xff]
        %v296 = vld [vmem:[#allocation3 + $0x28] sm:$0xff]
        %v297 = vld [vmem:[#allocation3 + $0x30] sm:$0xff]
        %v298 = vld [vmem:[#allocation3 + $0x38] sm:$0xff]
        %v299 = vadd.s32 %v291, %v251
        %v300 = vadd.s32 %v292, %v252
        %v301 = vadd.s32 %v293, %v253
        %v302 = vadd.s32 %v294, %v254
        %v303 = vadd.s32 %v295, %v255
        %v304 = vadd.s32 %v296, %v256
        %v305 = vadd.s32 %v297, %v257
        %v306 = vadd.s32 %v298, %v258
        %307 = vst [vmem:[#allocation3] sm:$0xff] %v299
        %308 = vst [vmem:[#allocation3 + $0x8] sm:$0xff] %v300
        %309 = vst [vmem:[#allocation3 + $0x10] sm:$0xff] %v301
        %310 = vst [vmem:[#allocation3 + $0x18] sm:$0xff] %v302
        %311 = vst [vmem:[#allocation3 + $0x20] sm:$0xff] %v303
        %312 = vst [vmem:[#allocation3 + $0x28] sm:$0xff] %v304
        %313 = vst [vmem:[#allocation3 + $0x30] sm:$0xff] %v305
        %314 = vst [vmem:[#allocation3 + $0x38] sm:$0xff] %v306
        // Predicated region
        $region33: #{tpu_custom_call.1} parent=23 // pred_check
          %p315 = pneg %p183
        $region34: #{tpu_custom_call.1} parent=23 // pred_check_branch
          %317 = sbr.rel (%p315) target = $region36
        $region35: #{tpu_custom_call.1} parent=23 // pred_region
          %v318 = vld [vmem:[#allocation2] sm:$0xff]
          %v319 = vld [vmem:[#allocation2 + $0x8] sm:$0xff]
          %v320 = vld [vmem:[#allocation2 + $0x10] sm:$0xff]
          %v321 = vld [vmem:[#allocation2 + $0x18] sm:$0xff]
          %v322 = vld [vmem:[#allocation2 + $0x20] sm:$0xff]
          %v323 = vld [vmem:[#allocation2 + $0x28] sm:$0xff]
          %v324 = vld [vmem:[#allocation2 + $0x30] sm:$0xff]
          %v325 = vld [vmem:[#allocation2 + $0x38] sm:$0xff]
          %v326 = vadd.f32 %v318, %v319
          %v327 = vadd.f32 %v326, %v320
          %v328 = vadd.f32 %v327, %v321
          %v329 = vadd.f32 %v328, %v322
          %v330 = vadd.f32 %v329, %v323
          %v331 = vadd.f32 %v330, %v324
          %v332 = vadd.f32 %v331, %v325
          %333 = vadd.xlane.f32.xlu0 %v332
          %v334 = vpop.xlane.xlu0 %333
          %v335 = vrot.slane %v334, 4
          %v336 = vadd.f32 %v334, %v335
          %v337 = vrot.slane %v336, 2
          %v338 = vadd.f32 %v336, %v337
          %v339 = vrot.slane %v338, 1
          %v340 = vadd.f32 %v338, %v339
          %s341 = vtos %v340
          %v342 = vld [vmem:[#allocation3] sm:$0xff]
          %v343 = vld [vmem:[#allocation3 + $0x8] sm:$0xff]
          %v344 = vld [vmem:[#allocation3 + $0x10] sm:$0xff]
          %v345 = vld [vmem:[#allocation3 + $0x18] sm:$0xff]
          %v346 = vld [vmem:[#allocation3 + $0x20] sm:$0xff]
          %v347 = vld [vmem:[#allocation3 + $0x28] sm:$0xff]
          %v348 = vld [vmem:[#allocation3 + $0x30] sm:$0xff]
          %v349 = vld [vmem:[#allocation3 + $0x38] sm:$0xff]
          %v350 = vadd.s32 %v342, %v346
          %v351 = vadd.s32 %v343, %v347
          %v352 = vadd.s32 %v344, %v348
          %v353 = vadd.s32 %v345, %v349
          %v354 = vadd.s32 %v350, %v351
          %v355 = vadd.s32 %v352, %v353
          %v356 = vadd.s32 %v354, %v355
          %v357 = vand.u32 %v356, 65535
          %v358 = vshrl.u32 %v356, 16
          %v359 = vcvt.s32.f32 %v357
          %v360 = vcvt.s32.f32 %v358
          %361 = vadd.xlane.f32.xlu0 %v359
          %v362 = vpop.xlane.xlu0 %361
          %363 = vadd.xlane.f32.xlu0 %v360
          %v364 = vpop.xlane.xlu0 %363
          %v365 = vcvt.f32.s32 %v362
          %v366 = vcvt.f32.s32 %v364
          %v367 = vshll.u32 %v366, 16
          %v368 = vadd.s32 %v367, %v365
          %v369 = vrot.slane %v368, 4
          %v370 = vadd.s32 %v368, %v369
          %v371 = vrot.slane %v370, 2
          %v372 = vadd.s32 %v370, %v371
          %v373 = vrot.slane %v372, 1
          %v374 = vadd.s32 %v372, %v373
          %s375 = vtos %v374
          %s376 = scvt.s32.f32 %s375
          %v377 = vstv %s341
          %v378 = vadd.f32 %v377, 0.0
          %vm379 = vcmask 0
          %380 = vst.msk [vmem:[%s179] sm:$0x1] %vm379, %v378
          %v381 = vstv %s376
          %v382 = vadd.f32 %v381, 0.0
          %383 = vst.msk [vmem:[%s182] sm:$0x1] %vm379, %v382
        $region36: #{tpu_custom_call.1} parent=23 // pred_fallthru
          _
        %p384 = scmp.lt.s32.totalorder %s21, 1
        %s385 = scalar_select %p384, %s21, 1
        %s386 = scalar_lea.vmem %s1, %s385
        %p387 = scmp.lt.s32.totalorder %s21, 1
        %s388 = scalar_select %p387, %s21, 1
        %s389 = scalar_lea.vmem %s2, %s388
        // Predicated region
        $region37: #{tpu_custom_call.1} parent=23 // pred_check
          %p390 = pneg %p75
        $region38: #{tpu_custom_call.1} parent=23 // pred_check_branch
          %392 = sbr.rel (%p390) target = $region40
        $region39: #{tpu_custom_call.1} parent=23 // pred_region
          _
        $region40: #{tpu_custom_call.1} parent=23 // pred_fallthru
          _
        // Predicated region
        $region41: #{tpu_custom_call.1} parent=23 // pred_check
          %p393 = pneg %p101
        $region42: #{tpu_custom_call.1} parent=23 // pred_check_branch
          %395 = sbr.rel (%p393) target = $region44
        $region43: #{tpu_custom_call.1} parent=23 // pred_region
          _
        $region44: #{tpu_custom_call.1} parent=23 // pred_fallthru
          _
      $region24: #{tpu_custom_call.1} parent=5 // pred_fallthru
        _
      %p396 = scmp.le.s32.totalorder 2, %s12
      // Predicated region
      $region45: #{tpu_custom_call.1} parent=5 // pred_check
        %p397 = pneg %p396
      $region46: #{tpu_custom_call.1} parent=5 // pred_check_branch
        %399 = sbr.rel (%p397) target = $region48
      $region47: #{tpu_custom_call.1} parent=5 // pred_region
        %s400 = ssub.s32 %s12, 2
        // Predicated region
        $region49: #{tpu_custom_call.1} parent=47 // pred_check
          %p401 = pneg %p81
        $region50: #{tpu_custom_call.1} parent=47 // pred_check_branch
          %403 = sbr.rel (%p401) target = $region52
        $region51: #{tpu_custom_call.1} parent=47 // pred_region
          %p404 = scmp.lt.s32.totalorder %s23, 1
          %s405 = scalar_select %p404, %s23, 1
          %s406 = scalar_lea.vmem %s1, %s405
        $region52: #{tpu_custom_call.1} parent=47 // pred_fallthru
          _
        // Predicated region
        $region53: #{tpu_custom_call.1} parent=47 // pred_check
          %p407 = pneg %p107
        $region54: #{tpu_custom_call.1} parent=47 // pred_check_branch
          %409 = sbr.rel (%p407) target = $region56
        $region55: #{tpu_custom_call.1} parent=47 // pred_region
          %p410 = scmp.lt.s32.totalorder %s23, 1
          %s411 = scalar_select %p410, %s23, 1
          %s412 = scalar_lea.vmem %s2, %s411
        $region56: #{tpu_custom_call.1} parent=47 // pred_fallthru
          _
      $region48: #{tpu_custom_call.1} parent=5 // pred_fallthru
        _
    $region6: #{tpu_custom_call.1} parent=1 // loop_footer
      %s16 = sadd.s32 1, %s12
    $region7: #{tpu_custom_call.1} parent=1 // loop_footer_branch
      %11 = sbr.rel target = $region3
    $region8: #{tpu_custom_call.1} parent=1 // loop_exit
      _
    %413 = vsyncpa [#allocation5], 1
    %s414 = scalar_lea.sflag [#allocation5], 1
    %415 = vsyncpa %s414, 1

</llo_original>
